<compile_context>
chip_gen: v7x
topology: tpu7x:2x2x1
jax: 0.10.0
libtpu: 0.0.40
codegen_flags: <defaults>
</compile_context>

<pallas_src>
import jax
import jax.numpy as jnp
from jax import lax
from jax.experimental import pallas as pl
from jax.experimental.pallas import tpu as pltpu


def _cdiv(a, b):
    return -(-a // b)


def _round_up(a, m):
    return _cdiv(a, m) * m


def _vmem_capacity_bytes(default=64 << 20):
    """Per-core VMEM capacity; falls back to a safe default if unavailable."""
    try:
        info = pltpu.get_tpu_info()
        cap = getattr(info, "vmem_capacity_bytes", None)
        if cap:
            return int(cap)
    except Exception:
        pass
    return default


def _linear_single_kernel(x_ref, w_ref, b_ref, o_ref):
    """Single reduction step: whole feature row in one lane-dense pass."""
    x = x_ref[...].astype(jnp.float32)          # (TB, F)
    w = w_ref[...].astype(jnp.float32)          # (1, F), broadcasts over rows
    # One VPU multiply + one XLU lane-reduce per batch tile; bias from SMEM.
    y = jnp.sum(x * w, axis=-1, keepdims=True) + b_ref[0]
    o_ref[...] = y.astype(o_ref.dtype)


def _make_multistep_kernel(F, TF):
    """Tiled-reduction kernel for very large F (lane-dense accumulator)."""
    rem = F % TF
    n_chunks = TF // 128        # TF is always a multiple of 128 on this path

    def kernel(x_ref, w_ref, b_ref, o_ref, acc_ref):
        k = pl.program_id(1)

        @pl.when(k == 0)
        def _init():
            acc_ref[...] = jnp.zeros_like(acc_ref)

        x = x_ref[...].astype(jnp.float32)      # (TB, TF)
        w = w_ref[...].astype(jnp.float32)      # (1, TF)
        xw = x * w
        if rem != 0:
            # Mask lanes past F in the ragged last feature tile.  Select is
            # NaN-safe, so any garbage in the over-covered region is ignored.
            lane = lax.broadcasted_iota(jnp.int32, xw.shape, 1)
            xw = jnp.where(lane + k * TF < F, xw, 0.0)

        # Lane-dense accumulate: pure VPU adds over 128-lane chunks (aligned
        # static slices, no copies).  The single cross-lane XLU reduce happens
        # once, in the finalize branch.
        acc = acc_ref[...]
        for j in range(n_chunks):
            acc = acc + xw[:, j * 128:(j + 1) * 128]
        acc_ref[...] = acc

        @pl.when(k == pl.num_programs(1) - 1)
        def _finalize():
            y = jnp.sum(acc_ref[...], axis=-1, keepdims=True) + b_ref[0]
            o_ref[...] = y.astype(o_ref.dtype)

    return kernel


def linear_net_forward(x, weight, bias, *, block_rows=None, block_feats=None,
                       force_pallas=False):
    """Pallas equivalent of LinearNet.forward (y = x @ W.T + b).

    Args:
      x:      (B, F) float32 or bfloat16
      weight: (1, F) (PyTorch nn.Linear weight layout)
      bias:   (1,)
    Returns:
      (B, 1) array with x's dtype.
    """
    B, F = x.shape
    out_dtype = x.dtype
    itemsize = jnp.dtype(x.dtype).itemsize

    # Tiny-problem gate: a pallas_call boundary costs more than a fused XLA
    # GEMV when the whole problem is a few KiB.
    if not force_pallas and B * F * itemsize < (1 << 20):
        return (x @ weight.T + bias).astype(out_dtype)

    # --- Chip-aware VMEM budget -------------------------------------------
    vmem_cap = _vmem_capacity_bytes()
    vmem_limit = max(32 << 20, min((vmem_cap * 3) // 4, 96 << 20))
    x_block_budget = vmem_limit // 6          # 2 x-buffers + weight + out + slack

    sub = 16 if itemsize == 2 else 8          # sublane multiple for batch tiles

    # --- Feature (lane / reduction) tiling ---------------------------------
    if block_feats is not None and block_feats < F:
        TF = max(128, (block_feats // 128) * 128)        # explicit (testing)
    elif F * itemsize * sub <= x_block_budget:
        TF = F                                           # single reduction step
    else:
        TF = min(8192, max(128, (x_block_budget // (sub * itemsize)) // 128 * 128))
    single_step = TF >= F
    if single_step:
        TF = F
    nF = _cdiv(F, TF)

    # --- Batch (sublane) tiling --------------------------------------------
    max_tb = max(sub, (x_block_budget // (TF * itemsize)) // sub * sub)
    if block_rows is not None:
        max_tb = max(sub, min(max_tb, _round_up(block_rows, sub)))
    if B <= max(2 * sub, 16):
        TB = B                                           # TB == B is always legal
    else:
        # Aim for >= 2 batch tiles so v7x's second TensorCore gets work.
        TB = max(sub, min(max_tb, _round_up(_cdiv(B, 2), sub)))
    nB = _cdiv(B, TB)

    w_row = weight.reshape(1, F)                         # lane-dense (1, F)
    b1 = bias.reshape(1).astype(jnp.float32)             # SMEM scalar

    if single_step:
        kernel = _linear_single_kernel
        grid = (nB,)
        in_specs = [
            # x: streamed, double-buffered per batch tile (ragged tail over-covered).
            pl.BlockSpec((TB, F), lambda i: (i, 0)),
            # weight: constant block index -> fetched once, VMEM-resident.
            pl.BlockSpec((1, F), lambda i: (0, 0)),
            # bias: one scalar in SMEM.
            pl.BlockSpec(memory_space=pltpu.MemorySpace.SMEM),
        ]
        out_specs = pl.BlockSpec((TB, 1), lambda i: (i, 0))
        scratch = []
        dims = ("parallel",)
    else:
        kernel = _make_multistep_kernel(F=F, TF=TF)
        grid = (nB, nF)
        in_specs = [
            pl.BlockSpec((TB, TF), lambda i, k: (i, k)),
            # weight tile is re-fetched each k step (index changes with k);
            # negligible traffic compared with x.
            pl.BlockSpec((1, TF), lambda i, k: (0, k)),
            pl.BlockSpec(memory_space=pltpu.MemorySpace.SMEM),
        ]
        out_specs = pl.BlockSpec((TB, 1), lambda i, k: (i, 0))
        scratch = [pltpu.VMEM((TB, 128), jnp.float32)]
        dims = ("parallel", "arbitrary")

    return pl.pallas_call(
        kernel,
        out_shape=jax.ShapeDtypeStruct((B, 1), out_dtype),
        grid_spec=pltpu.PrefetchScalarGridSpec(
            num_scalar_prefetch=0,
            grid=grid,
            in_specs=in_specs,
            out_specs=out_specs,
            scratch_shapes=scratch,
        ),
        compiler_params=pltpu.CompilerParams(
            dimension_semantics=dims,
            vmem_limit_bytes=int(vmem_limit)),
    )(x, w_row, b1)


if __name__ == "__main__":
    # Case 1: the module's natural small shapes (single-step path, one tile).
    n_feature = 32
    batch = 8
    kx, kw, kb = jax.random.split(jax.random.PRNGKey(0), 3)
    x = jax.random.normal(kx, (batch, n_feature), dtype=jnp.float32)
    weight = jax.random.normal(kw, (1, n_feature), dtype=jnp.float32) * 0.1
    bias = jax.random.normal(kb, (1,), dtype=jnp.float32) * 0.1

    y = linear_net_forward(x, weight, bias, force_pallas=True)
    jax.block_until_ready(y)
    y_ref = x @ weight.T + bias
    assert y.shape == (batch, 1)
    assert jnp.allclose(y, y_ref, atol=1e-5, rtol=1e-5)

    # Case 2: forces the multi-step reduction path with ragged batch AND ragged
    # feature tiles (no host-side padding; in-kernel mask + OOB-write discard).
    b2, f2 = 37, 300
    k2x, k2w, k2b = jax.random.split(jax.random.PRNGKey(1), 3)
    x2 = jax.random.normal(k2x, (b2, f2), dtype=jnp.float32)
    w2 = jax.random.normal(k2w, (1, f2), dtype=jnp.float32) * 0.05
    b2v = jax.random.normal(k2b, (1,), dtype=jnp.float32) * 0.05

    y2 = linear_net_forward(x2, w2, b2v, block_rows=8, block_feats=128,
                            force_pallas=True)
    jax.block_until_ready(y2)
    y2_ref = x2 @ w2.T + b2v
    assert y2.shape == (b2, 1)
    assert jnp.allclose(y2, y2_ref, atol=1e-4, rtol=1e-4)

    # Case 3: bf16 input path (halved HBM bytes), single-step, non-aligned B/F.
    b3, f3 = 20, 48
    k3x, k3w, k3b = jax.random.split(jax.random.PRNGKey(2), 3)
    x3 = jax.random.normal(k3x, (b3, f3), dtype=jnp.float32).astype(jnp.bfloat16)
    w3 = (jax.random.normal(k3w, (1, f3), dtype=jnp.float32) * 0.1).astype(jnp.bfloat16)
    b3v = (jax.random.normal(k3b, (1,), dtype=jnp.float32) * 0.1).astype(jnp.bfloat16)

    y3 = linear_net_forward(x3, w3, b3v, force_pallas=True)
    jax.block_until_ready(y3)
    y3_ref = (x3.astype(jnp.float32) @ w3.astype(jnp.float32).T
              + b3v.astype(jnp.float32))
    assert y3.shape == (b3, 1)
    assert jnp.allclose(y3.astype(jnp.float32), y3_ref, atol=5e-2, rtol=5e-2)

    print("KERNEL_OK")
</pallas_src>

<mosaic_0001>
module attributes {stable_mosaic.version = 11 : i64} {
  func.func @_linear_single_kernel(%arg0: i32, %arg1: memref<8x32xf32, #tpu.memory_space<vmem>>, %arg2: memref<1x32xf32, #tpu.memory_space<vmem>>, %arg3: memref<1xf32, #tpu.memory_space<smem>>, %arg4: memref<8x1xf32, #tpu.memory_space<vmem>>) attributes {dimension_semantics = [#tpu.dimension_semantics<parallel>], iteration_bounds = array<i64: 1>, scalar_prefetch = 0 : i64, scratch_operands = 0 : i64, tpu.core_type = #tpu.core_type<tc>, window_params = [{transform_indices = @transform_0, window_bounds = array<i64: 8, 32>}, {pipeline_mode = #tpu.pipeline_mode<synchronous>, transform_indices = @transform_1, window_bounds = array<i64: 1, 32>}, {transform_indices = @transform_2, window_bounds = array<i64: 1>}, {transform_indices = @transform_3, window_bounds = array<i64: 8, 1>}]} {
    %c0 = arith.constant 0 : index
    %c0_0 = arith.constant 0 : index
    %0 = vector.load %arg1[%c0, %c0_0] : memref<8x32xf32, #tpu.memory_space<vmem>>, vector<8x32xf32>
    %c0_1 = arith.constant 0 : index
    %c0_2 = arith.constant 0 : index
    %1 = vector.load %arg2[%c0_1, %c0_2] : memref<1x32xf32, #tpu.memory_space<vmem>>, vector<1x32xf32>
    %2 = vector.broadcast %1 : vector<1x32xf32> to vector<8x32xf32>
    %3 = arith.mulf %0, %2 : vector<8x32xf32>
    %cst = arith.constant dense<0.000000e+00> : vector<8xf32>
    %4 = vector.multi_reduction <add>, %3, %cst [1] : vector<8x32xf32> to vector<8xf32>
    %5 = vector.shape_cast %4 : vector<8xf32> to vector<8x1xf32>
    %c0_3 = arith.constant 0 : index
    %6 = memref.load %arg3[%c0_3] : memref<1xf32, #tpu.memory_space<smem>>
    %7 = vector.broadcast %6 : f32 to vector<8x1xf32>
    %8 = arith.addf %5, %7 : vector<8x1xf32>
    %c0_4 = arith.constant 0 : index
    %c0_5 = arith.constant 0 : index
    %9 = vector.load %arg4[%c0_4, %c0_5] : memref<8x1xf32, #tpu.memory_space<vmem>>, vector<8x1xf32>
    tpu.vector_store %arg4[%c0_4, %c0_5], %8 {strides = array<i32>} : memref<8x1xf32, #tpu.memory_space<vmem>>, vector<8x1xf32>,
    return
  }
  func.func @transform_0(%arg0: i32) -> (i32, i32) {
    %c0_i32 = arith.constant 0 : i32
    %c0_i32_0 = arith.constant 0 : i32
    return %arg0, %c0_i32 : i32, i32
  }
  func.func @transform_1(%arg0: i32) -> (i32, i32) {
    %c0_i32 = arith.constant 0 : i32
    %c0_i32_0 = arith.constant 0 : i32
    %c0_i32_1 = arith.constant 0 : i32
    return %c0_i32, %c0_i32_0 : i32, i32
  }
  func.func @transform_2(%arg0: i32) -> i32 {
    %c0_i32 = arith.constant 0 : i32
    %c0_i32_0 = arith.constant 0 : i32
    return %c0_i32 : i32
  }
  func.func @transform_3(%arg0: i32) -> (i32, i32) {
    %c0_i32 = arith.constant 0 : i32
    %c0_i32_0 = arith.constant 0 : i32
    return %arg0, %c0_i32 : i32, i32
  }
}

</mosaic_0001>

<llo_original>
// kernel: tpu_custom_call.1
$region0: #{tpu_custom_call.1}
  #allocation0 [shape = 'u32[]', space=smem, size = 0x4, offset = 0x4, fixed_abs, tag = 'smem constant byte address 0x4 - core index']
  #allocation1 [shape = 'u32[144,128]{1,0:T(1,128)}', space=vmem, size = 0x12000, scoped, tag = 'internal scratch']
  #allocation2 [shape = 'f32[1]{0:T(128)S(6)}', space=smem, size = 0x200, scoped, tag = 'scoped memory for tpu_custom_call.1']
  %s0 = inlined_call_operand.hbm [shape: f32[8,32], index: 0, kind: input, shape index: {}]
  %s1 = inlined_call_operand.vmem [shape: f32[1,32], index: 1, kind: input, shape index: {}]
  %s2 = inlined_call_operand.<no memory space> [shape: f32[1], index: 2, kind: input, shape index: {}]
  %s3 = inlined_call_operand.vmem [shape: f32[8,1], index: 3, kind: output, shape index: {}]
  %s4 = sld [smem:[#allocation0]]
  $region26: #{tpu_custom_call.1} parent=0
    _
  %s6 = ssub.s32 1, %s4
  %s7 = scalar_select 0, %s6, %s4
  %8 = sst [smem:[#allocation2]] %s2
  $region1: #{tpu_custom_call.1} parent=0
    #allocation3 [shape = 'u8[4096]{0}', space=vmem, size = 0x1000, scoped, tag = 'input window, operand 0, single buffered']
    #allocation4 [shape = 's32[1]{0}', space=sflag, size = 0x4, scoped, tag = 'scoped memory for tpu_custom_call.1']
    %9 = vsyncpa [#allocation4], 0
    // Predicated region
    $region2: #{tpu_custom_call.1} parent=1 // pred_check
      _
    $region3: #{tpu_custom_call.1} parent=1 // pred_check_branch
      %11 = sbr.rel (0) target = $region5
    $region4: #{tpu_custom_call.1} parent=1 // pred_region
      %s13 = ssub.s32 128, 128
      %14 = vsyncadd [#allocation4], %s13
      %s16 = sshll.u32 [#allocation3], 4
      %s17 = int_to_ptr.vmem [resolvable:$true] %s16
      %19 = dma.hbm_to_vmem [thread:$0]  %s0, 128, %s17, [#allocation4]
    $region5: #{tpu_custom_call.1} parent=1 // pred_fallthru
      _
    // Predicated region
    $region6: #{tpu_custom_call.1} parent=1 // pred_check
      _
    $region7: #{tpu_custom_call.1} parent=1 // pred_check_branch
      %21 = sbr.rel (0) target = $region9
    $region8: #{tpu_custom_call.1} parent=1 // pred_region
      _
    $region9: #{tpu_custom_call.1} parent=1 // pred_fallthru
      _
    // Predicated region
    $region10: #{tpu_custom_call.1} parent=1 // pred_check
      _
    $region11: #{tpu_custom_call.1} parent=1 // pred_check_branch
      %23 = sbr.rel (0) target = $region13
    $region12: #{tpu_custom_call.1} parent=1 // pred_region
      _
    $region13: #{tpu_custom_call.1} parent=1 // pred_fallthru
      _
    // Predicated region
    $region14: #{tpu_custom_call.1} parent=1 // pred_check
      _
    $region15: #{tpu_custom_call.1} parent=1 // pred_check_branch
      %25 = sbr.rel (0) target = $region17
    $region16: #{tpu_custom_call.1} parent=1 // pred_region
      %26 = dma.done [#allocation4], 128
    $region17: #{tpu_custom_call.1} parent=1 // pred_fallthru
      _
    %v27 = vld [vmem:[#allocation3] sm:$0xff]
    %v28 = vld [vmem:[%s1] sm:$0x1]
    %v30 = vlaneseq
    %v31 = vshrl.u32 %v30, 7
    %v32 = vsub.s32 0, %v31
    %v33 = vrot.slane %v28, %v32
    %v35 = vmul.f32 %v27, %v33
    %vm36 = vcmask 261120
    %v37 = vsel %vm36, %v35, 0.0
    %38 = vadd.xlane.f32.xlu0 %v37
    %v39 = vpop.xlane.xlu0 %38
    %s40 = sld [smem:[#allocation2]]
    %v41 = vstv %s40
    %v42 = vadd.f32 %v39, %v41
    %vm43 = vcmask 7168
    %44 = vst.msk [vmem:[%s3] sm:$0xff] %vm43, %v42
    // Predicated region
    $region18: #{tpu_custom_call.1} parent=1 // pred_check
      _
    $region19: #{tpu_custom_call.1} parent=1 // pred_check_branch
      %46 = sbr.rel (0) target = $region21
    $region20: #{tpu_custom_call.1} parent=1 // pred_region
      _
    $region21: #{tpu_custom_call.1} parent=1 // pred_fallthru
      _
    // Predicated region
    $region22: #{tpu_custom_call.1} parent=1 // pred_check
      _
    $region23: #{tpu_custom_call.1} parent=1 // pred_check_branch
      %48 = sbr.rel (0) target = $region25
    $region24: #{tpu_custom_call.1} parent=1 // pred_region
      _
    $region25: #{tpu_custom_call.1} parent=1 // pred_fallthru
      _
    %49 = vsyncpa [#allocation4], 1

</llo_original>
